<compile_context>
chip_gen: v7x
topology: tpu7x:2x2x1
jax: 0.10.0
libtpu: 0.0.40
codegen_flags: <defaults>
</compile_context>

<pallas_src>
import functools
import math

import jax
import jax.numpy as jnp
from jax.experimental import pallas as pl
from jax.experimental.pallas import tpu as pltpu


_SQRT_2_OVER_PI = math.sqrt(2.0 / math.pi)


def _gelu_tanh(x):
    # Matches torch.nn.functional.gelu(x, approximate='tanh').
    return 0.5 * x * (1.0 + jnp.tanh(_SQRT_2_OVER_PI * (x + 0.044715 * x * x * x)))


# ----------------------------------------------------------------------------
# Kernel
# ----------------------------------------------------------------------------
def _gemma_mlp_kernel(x_ref, wgu_ref, wd_ref, o_ref, acc_ref, *, block_n):
    # Grid = (i: row tiles, j: intermediate tiles).  j is the reduction axis of
    # the down projection, so the accumulator/output are revisited over j.
    j = pl.program_id(1)

    x = x_ref[...]                                                    # (bm, H)
    # Single fused [gate | up] matmul for this intermediate tile.
    gu = jnp.dot(x, wgu_ref[...], preferred_element_type=jnp.float32)  # (bm, 2*bn)
    g = gu[:, :block_n]
    u = gu[:, block_n:]
    h = (_gelu_tanh(g) * u).astype(wd_ref.dtype)                       # (bm, bn)
    partial = jnp.dot(h, wd_ref[...], preferred_element_type=jnp.float32)  # (bm, H)

    @pl.when(j == 0)
    def _():
        acc_ref[...] = partial          # no zero-fill + reload on the first step

    @pl.when(j > 0)
    def _():
        acc_ref[...] += partial

    @pl.when(j == pl.num_programs(1) - 1)
    def _():
        o_ref[...] = acc_ref[...].astype(o_ref.dtype)


# ----------------------------------------------------------------------------
# Generation-aware configuration
# ----------------------------------------------------------------------------
_GEN_CFG = {
    # block_m: row tile target for large M; block_n: intermediate tile target;
    # vmem_budget: usable VMEM; cores: TensorCores per chip.
    "v5e":     dict(block_m=256, block_n=1024, vmem_budget=100 << 20, cores=1),
    "v6e":     dict(block_m=768, block_n=512,  vmem_budget=100 << 20, cores=1),
    "v7x":     dict(block_m=512, block_n=512,  vmem_budget=48 << 20,  cores=2),
    "unknown": dict(block_m=512, block_n=512,  vmem_budget=48 << 20,  cores=1),
}


def _tpu_generation() -> str:
    try:
        kind = jax.devices()[0].device_kind.lower()
    except Exception:
        return "unknown"
    if "v6" in kind:
        return "v6e"
    if "7" in kind:
        return "v7x"
    if "v5" in kind or "v4" in kind:
        return "v5e"
    return "unknown"


def _vmem_budget(default_budget: int) -> int:
    # Refine the table budget from the actual physical VMEM when queryable.
    try:
        cap = int(pltpu.get_tpu_info().vmem_capacity_bytes)
        if cap > 0:
            return min(max(default_budget, int(0.75 * cap)), int(0.85 * cap))
    except Exception:
        pass
    return default_budget


def _round_up(x: int, m: int) -> int:
    return ((x + m - 1) // m) * m


def _round_down(x: int, m: int) -> int:
    return max(m, (x // m) * m)


def _pick_intermediate_tile(dim: int, target: int, align: int = 128) -> int:
    """Largest multiple-of-`align` divisor of `dim` that is <= target."""
    if dim <= target:
        return dim
    t = _round_down(target, align)
    while t >= align:
        if dim % t == 0:
            return t
        t -= align
    if dim <= 2 * target:
        return dim
    raise ValueError(
        f"intermediate_size={dim} has no multiple-of-{align} divisor <= {target}; "
        f"pass an explicit block_n that divides {dim}.")


# ----------------------------------------------------------------------------
# One-time weight preparation (call at model-load time, NOT per step)
# ----------------------------------------------------------------------------
def prepare_gemma_mlp_weights(gate_w, up_w, down_w, block_n):
    """gate_w/up_w: (I, H); down_w: (H, I)  (PyTorch nn.Linear layout).

    Returns:
      wgu  : (H, 2*I)  gate/up transposed and interleaved per block_n-tile so a
             grid step reads one contiguous (H, 2*block_n) slab:
             [gate tile j | up tile j] for each j.
      wd_t : (I, H)    down_proj transposed.
    """
    I, H = gate_w.shape
    assert up_w.shape == (I, H) and down_w.shape == (H, I)
    assert I % block_n == 0, (I, block_n)
    nt = I // block_n
    wg_t = gate_w.T.reshape(H, nt, block_n)
    wu_t = up_w.T.reshape(H, nt, block_n)
    wgu = jnp.stack([wg_t, wu_t], axis=2).reshape(H, 2 * I)
    wd_t = down_w.T
    return wgu, wd_t


# ----------------------------------------------------------------------------
# Fused MLP on prepared weights
# ----------------------------------------------------------------------------
def gemma_mlp_prepared(x, wgu, wd_t, *, block_n, block_m=None):
    orig_shape = x.shape
    H = orig_shape[-1]
    I = wgu.shape[1] // 2
    assert wgu.shape == (H, 2 * I) and wd_t.shape == (I, H)
    assert I % block_n == 0

    x2d = x.reshape(-1, H)
    M = x2d.shape[0]

    gen = _tpu_generation()
    cfg = _GEN_CFG[gen]
    budget = _vmem_budget(cfg["vmem_budget"])

    # Sublane packing multiple for the activation dtype (8 f32, 16 bf16, 32 i8).
    packing = max(8, 32 // jnp.dtype(x2d.dtype).itemsize)

    bm = block_m if block_m is not None else cfg["block_m"]
    bm = min(bm, _round_up(M, packing))
    bm = _round_down(bm, packing)

    # v7x has two TensorCores: make sure the parallel row axis has >= 2 tiles.
    if cfg["cores"] > 1 and pl.cdiv(M, bm) < cfg["cores"] and M > packing:
        bm = _round_up(pl.cdiv(M, cfg["cores"]), packing)

    bn = block_n
    xb = jnp.dtype(x2d.dtype).itemsize
    wb = jnp.dtype(wgu.dtype).itemsize

    def vmem_need(bm_):
        return (2 * bm_ * H * xb            # x tile (double-buffered)
                + 2 * H * (2 * bn) * wb     # fused [gate|up] weight tile
                + 2 * bn * H * wb           # down weight tile
                + 2 * bm_ * H * xb          # output tile
                + bm_ * H * 4               # f32 accumulator scratch
                + 4 * bm_ * bn * 4)         # f32 gu / h temporaries (approx)

    # Size tiles from the budget (shrink bm) rather than clamping the budget.
    while vmem_need(bm) + (4 << 20) > budget and bm > packing:
        bm = _round_down(bm // 2, packing)
    need = vmem_need(bm)
    if need + (4 << 20) > budget:
        raise ValueError(
            f"block_n={bn} does not fit the ~{budget >> 20} MiB VMEM budget on "
            f"this TPU generation ({gen}); pass a smaller block_n.")
    vmem_limit = int(max(16 << 20, min(budget, need + (4 << 20))))

    grid = (pl.cdiv(M, bm), I // bn)
    kernel = functools.partial(_gemma_mlp_kernel, block_n=bn)

    out2d = pl.pallas_call(
        kernel,
        out_shape=jax.ShapeDtypeStruct((M, H), x.dtype),
        grid_spec=pltpu.PrefetchScalarGridSpec(
            num_scalar_prefetch=0,
            grid=grid,
            in_specs=[
                pl.BlockSpec((bm, H), lambda i, j: (i, 0)),       # x (resident over j)
                pl.BlockSpec((H, 2 * bn), lambda i, j: (0, j)),   # [gate|up] tile
                pl.BlockSpec((bn, H), lambda i, j: (j, 0)),       # down tile
            ],
            out_specs=pl.BlockSpec((bm, H), lambda i, j: (i, 0)),
            scratch_shapes=[pltpu.VMEM((bm, H), jnp.float32)],
        ),
        compiler_params=pltpu.CompilerParams(
            dimension_semantics=("parallel", "arbitrary"),
            vmem_limit_bytes=vmem_limit),
    )(x2d, wgu, wd_t)

    return out2d.reshape(orig_shape)


def gemma_mlp(x, gate_w, up_w, down_w, *, block_m=None, block_n=None):
    """Convenience wrapper taking PyTorch-layout weights.

    NOTE: in a real model call prepare_gemma_mlp_weights() ONCE at load time
    and use gemma_mlp_prepared() in the step function so the transposed /
    interleaved weight copies are not re-materialized in HBM every step.
    """
    I, H = gate_w.shape
    gen = _tpu_generation()
    target = max(block_n if block_n is not None else _GEN_CFG[gen]["block_n"], 128)
    bn = _pick_intermediate_tile(I, target)
    wgu, wd_t = prepare_gemma_mlp_weights(gate_w, up_w, down_w, bn)
    return gemma_mlp_prepared(x, wgu, wd_t, block_n=bn, block_m=block_m)


# ----------------------------------------------------------------------------
# Reference + demo
# ----------------------------------------------------------------------------
def _reference(x, gate_w, up_w, down_w):
    xf = x.astype(jnp.float32)
    g = xf @ gate_w.astype(jnp.float32).T
    u = xf @ up_w.astype(jnp.float32).T
    h = _gelu_tanh(g) * u
    return h @ down_w.astype(jnp.float32).T


if __name__ == "__main__":
    key = jax.random.PRNGKey(0)
    batch, seq, hidden, intermediate = 2, 8, 64, 256

    kx, kg, ku, kd = jax.random.split(key, 4)
    x = jax.random.normal(kx, (batch, seq, hidden), dtype=jnp.float32)
    gate_w = 0.05 * jax.random.normal(kg, (intermediate, hidden), dtype=jnp.float32)
    up_w = 0.05 * jax.random.normal(ku, (intermediate, hidden), dtype=jnp.float32)
    down_w = 0.05 * jax.random.normal(kd, (hidden, intermediate), dtype=jnp.float32)

    # Small explicit blocks so the 2x2 (row tiles x reduction tiles) grid is
    # actually exercised at toy shapes; production uses generation defaults.
    out = gemma_mlp(x, gate_w, up_w, down_w, block_m=8, block_n=128)
    out = jax.block_until_ready(out)

    ref = _reference(x, gate_w, up_w, down_w)
    assert out.shape == x.shape and out.dtype == x.dtype
    err = float(jnp.max(jnp.abs(out.astype(jnp.float32) - ref)))
    assert err < 2e-2, err
    print("KERNEL_OK")
</pallas_src>

<mosaic_0001>
module attributes {stable_mosaic.version = 11 : i64} {
  func.func @_gemma_mlp_kernel(%arg0: i32, %arg1: i32, %arg2: memref<8x64xf32, #tpu.memory_space<vmem>>, %arg3: memref<64x256xf32, #tpu.memory_space<vmem>>, %arg4: memref<128x64xf32, #tpu.memory_space<vmem>>, %arg5: memref<8x64xf32, #tpu.memory_space<vmem>>, %arg6: memref<8x64xf32, #tpu.memory_space<vmem>>) attributes {dimension_semantics = [#tpu.dimension_semantics<parallel>, #tpu.dimension_semantics<arbitrary>], iteration_bounds = array<i64: 2, 2>, scalar_prefetch = 0 : i64, scratch_operands = 1 : i64, tpu.core_type = #tpu.core_type<tc>, window_params = [{transform_indices = @transform_0, window_bounds = array<i64: 8, 64>}, {transform_indices = @transform_1, window_bounds = array<i64: 64, 256>}, {transform_indices = @transform_2, window_bounds = array<i64: 128, 64>}, {transform_indices = @transform_3, window_bounds = array<i64: 8, 64>}]} {
    %c0 = arith.constant 0 : index
    %c0_0 = arith.constant 0 : index
    %0 = vector.load %arg2[%c0, %c0_0] : memref<8x64xf32, #tpu.memory_space<vmem>>, vector<8x64xf32>
    %c0_1 = arith.constant 0 : index
    %c0_2 = arith.constant 0 : index
    %1 = vector.load %arg3[%c0_1, %c0_2] : memref<64x256xf32, #tpu.memory_space<vmem>>, vector<64x256xf32>
    %cst = arith.constant dense<0.000000e+00> : vector<8x256xf32>
    %2 = tpu.matmul %0, %1, %cst {dimension_numbers = #tpu.dot_dimension_numbers<[1], [0], [0], [1], [0, 0, 1, 1], [], []>} : vector<8x64xf32>, vector<64x256xf32>, vector<8x256xf32> -> vector<8x256xf32>
    %3 = vector.extract_strided_slice %2 {offsets = [0, 0], sizes = [8, 128], strides = [1, 1]} : vector<8x256xf32> to vector<8x128xf32>
    %4 = vector.extract_strided_slice %2 {offsets = [0, 128], sizes = [8, 128], strides = [1, 1]} : vector<8x256xf32> to vector<8x128xf32>
    %cst_3 = arith.constant 5.000000e-01 : f32
    %5 = vector.broadcast %cst_3 : f32 to vector<8x128xf32>
    %6 = arith.mulf %5, %3 : vector<8x128xf32>
    %cst_4 = arith.constant 4.471500e-02 : f32
    %7 = vector.broadcast %cst_4 : f32 to vector<8x128xf32>
    %8 = arith.mulf %7, %3 : vector<8x128xf32>
    %9 = arith.mulf %8, %3 : vector<8x128xf32>
    %10 = arith.mulf %9, %3 : vector<8x128xf32>
    %11 = arith.addf %3, %10 : vector<8x128xf32>
    %cst_5 = arith.constant 0.797884583 : f32
    %12 = vector.broadcast %cst_5 : f32 to vector<8x128xf32>
    %13 = arith.mulf %12, %11 : vector<8x128xf32>
    %14 = math.tanh %13 : vector<8x128xf32>
    %cst_6 = arith.constant 1.000000e+00 : f32
    %15 = vector.broadcast %cst_6 : f32 to vector<8x128xf32>
    %16 = arith.addf %15, %14 : vector<8x128xf32>
    %17 = arith.mulf %6, %16 : vector<8x128xf32>
    %18 = arith.mulf %17, %4 : vector<8x128xf32>
    %c0_7 = arith.constant 0 : index
    %c0_8 = arith.constant 0 : index
    %19 = vector.load %arg4[%c0_7, %c0_8] : memref<128x64xf32, #tpu.memory_space<vmem>>, vector<128x64xf32>
    %cst_9 = arith.constant dense<0.000000e+00> : vector<8x64xf32>
    %20 = tpu.matmul %18, %19, %cst_9 {dimension_numbers = #tpu.dot_dimension_numbers<[1], [0], [0], [1], [0, 0, 1, 1], [], []>} : vector<8x128xf32>, vector<128x64xf32>, vector<8x64xf32> -> vector<8x64xf32>
    %c0_i32 = arith.constant 0 : i32
    %21 = arith.cmpi eq, %arg1, %c0_i32 : i32
    %22 = arith.extui %21 : i1 to i32
    %c0_i32_10 = arith.constant 0 : i32
    %23 = arith.cmpi ne, %22, %c0_i32_10 : i32
    scf.if %23 {
      %c0_14 = arith.constant 0 : index
      %c0_15 = arith.constant 0 : index
      %30 = vector.load %arg6[%c0_14, %c0_15] : memref<8x64xf32, #tpu.memory_space<vmem>>, vector<8x64xf32>
      tpu.vector_store %arg6[%c0_14, %c0_15], %20 {strides = array<i32>} : memref<8x64xf32, #tpu.memory_space<vmem>>, vector<8x64xf32>,
    } else {
    }
    %c0_i32_11 = arith.constant 0 : i32
    %24 = arith.cmpi sgt, %arg1, %c0_i32_11 : i32
    %25 = arith.extui %24 : i1 to i32
    %c0_i32_12 = arith.constant 0 : i32
    %26 = arith.cmpi ne, %25, %c0_i32_12 : i32
    scf.if %26 {
      %c0_14 = arith.constant 0 : index
      %c0_15 = arith.constant 0 : index
      %30 = vector.load %arg6[%c0_14, %c0_15] : memref<8x64xf32, #tpu.memory_space<vmem>>, vector<8x64xf32>
      %31 = arith.addf %30, %20 : vector<8x64xf32>
      %c0_16 = arith.constant 0 : index
      %c0_17 = arith.constant 0 : index
      %32 = vector.load %arg6[%c0_16, %c0_17] : memref<8x64xf32, #tpu.memory_space<vmem>>, vector<8x64xf32>
      tpu.vector_store %arg6[%c0_16, %c0_17], %31 {strides = array<i32>} : memref<8x64xf32, #tpu.memory_space<vmem>>, vector<8x64xf32>,
    } else {
    }
    %c1_i32 = arith.constant 1 : i32
    %27 = arith.cmpi eq, %arg1, %c1_i32 : i32
    %28 = arith.extui %27 : i1 to i32
    %c0_i32_13 = arith.constant 0 : i32
    %29 = arith.cmpi ne, %28, %c0_i32_13 : i32
    scf.if %29 {
      %c0_14 = arith.constant 0 : index
      %c0_15 = arith.constant 0 : index
      %30 = vector.load %arg6[%c0_14, %c0_15] : memref<8x64xf32, #tpu.memory_space<vmem>>, vector<8x64xf32>
      %c0_16 = arith.constant 0 : index
      %c0_17 = arith.constant 0 : index
      %31 = vector.load %arg5[%c0_16, %c0_17] : memref<8x64xf32, #tpu.memory_space<vmem>>, vector<8x64xf32>
      tpu.vector_store %arg5[%c0_16, %c0_17], %30 {strides = array<i32>} : memref<8x64xf32, #tpu.memory_space<vmem>>, vector<8x64xf32>,
    } else {
    }
    return
  }
  func.func @transform_0(%arg0: i32, %arg1: i32) -> (i32, i32) {
    %c0_i32 = arith.constant 0 : i32
    %c0_i32_0 = arith.constant 0 : i32
    return %arg0, %c0_i32 : i32, i32
  }
  func.func @transform_1(%arg0: i32, %arg1: i32) -> (i32, i32) {
    %c0_i32 = arith.constant 0 : i32
    %c0_i32_0 = arith.constant 0 : i32
    return %c0_i32, %arg1 : i32, i32
  }
  func.func @transform_2(%arg0: i32, %arg1: i32) -> (i32, i32) {
    %c0_i32 = arith.constant 0 : i32
    %c0_i32_0 = arith.constant 0 : i32
    return %arg1, %c0_i32 : i32, i32
  }
  func.func @transform_3(%arg0: i32, %arg1: i32) -> (i32, i32) {
    %c0_i32 = arith.constant 0 : i32
    %c0_i32_0 = arith.constant 0 : i32
    return %arg0, %c0_i32 : i32, i32
  }
}

</mosaic_0001>

<llo_original>
// kernel: tpu_custom_call.1
$region0: #{tpu_custom_call.1}
  #allocation0 [shape = 'u32[]', space=smem, size = 0x4, offset = 0x4, fixed_abs, tag = 'smem constant byte address 0x4 - core index']
  #allocation1 [shape = 'u32[144,128]{1,0:T(1,128)}', space=vmem, size = 0x12000, scoped, tag = 'internal scratch']
  #allocation2 [shape = 'f32[8,64]{1,0:T(8,128)}', space=vmem, size = 0x1000, scoped, tag = 'scratch operand']
  %s0 = inlined_call_operand.vmem [shape: f32[16,64], index: 0, kind: input, shape index: {}]
  %s1 = inlined_call_operand.vmem [shape: f32[64,512], index: 1, kind: input, shape index: {}]
  %s2 = inlined_call_operand.vmem [shape: f32[256,64], index: 2, kind: input, shape index: {}]
  %s3 = inlined_call_operand.hbm [shape: f32[16,64], index: 3, kind: output, shape index: {}]
  %s4 = sld [smem:[#allocation0]]
  $region80: #{tpu_custom_call.1} parent=0
    _
  %s6 = ssub.s32 1, %s4
  %s7 = scalar_select 0, %s6, %s4
  $region1: #{tpu_custom_call.1} parent=0
    #allocation3 [shape = 'u8[131072]{0}', space=vmem, size = 0x20000, scoped, tag = 'input window, operand 1']
    #allocation4 [shape = 'u8[8192]{0}', space=vmem, size = 0x2000, scoped, tag = 'output window, operand 0']
    #allocation5 [shape = 's32[2]{0}', space=sflag, size = 0x8, scoped, tag = 'scoped memory for tpu_custom_call.1']
    %8 = vsyncpa [#allocation5], 0
    %s9 = scalar_lea.sflag [#allocation5], 1
    %10 = vsyncpa %s9, 0
    loop: start=0, step=1, limit=6
    $region2: #{tpu_custom_call.1} parent=1 // loop_pre_header
      _
    $region3: #{tpu_custom_call.1} parent=1 // loop_header
      %s12 = sphi 0, %s16
      %p13 = scmp.ge.s32.totalorder %s12, 6
      %s19 = sphi 0, %s31
      %s20 = sphi 0, %s27
      %s21 = sphi 0, %s19
      %s22 = sphi 0, %s20
      %s23 = sphi 0, %s21
      %s24 = sphi 0, %s22
      %s34 = sphi 0, %s36
      %s37 = sphi 0, %s34
      %s38 = sphi 0, %s37
      %s54 = sphi 0, %s38
      %s60 = sphi 0, %s62
      %s63 = sphi 0, %s60
      %s64 = sphi 0, %s63
      %s80 = sphi 0, %s64
      %s86 = sphi 0, %s88
      %s89 = sphi 0, %s86
      %s90 = sphi 0, %s89
      %s106 = sphi 0, %s90
      %s112 = sphi 0, %s114
      %s115 = sphi 0, %s112
      %s116 = sphi 0, %s115
      %s132 = sphi 0, %s116
    $region4: #{tpu_custom_call.1} parent=1 // loop_header_branch
      %15 = sbr.rel (%p13) target = $region8
    $region5: #{tpu_custom_call.1} parent=1 // loop_body
      %s17 = ssub.s32 %s12, 1
      %s18 = ssub.s32 %s12, 2
      %s25 = sadd.s32 1, %s20
      %p26 = scmp.ge.s32.totalorder %s25, 2
      %s27 = scalar_select %p26, 0, %s25
      %s28 = sadd.s32 1, %s19
      %s29 = scalar_select %p26, %s28, %s19
      %p30 = scmp.ge.s32.totalorder %s29, 2
      %s31 = scalar_select %p30, 0, %s29
      %s32 = ssub.s32 %s19, %s31
      %p33 = scmp.eq.s32.totalorder %s32, 0
      %s35 = sadd.s32 %s34, 1
      %s36 = scalar_select %p33, %s34, %s35
      %p39 = pneg %p33
      %p40 = scmp.eq.s32.totalorder %s12, 3
      %p41 = por %p39, %p40
      %p42 = scmp.ne.s32.totalorder %s34, %s37
      %p43 = scmp.eq.s32.totalorder %s12, 0
      %p44 = por %p42, %p43
      %p45 = scmp.ne.s32.totalorder %s34, %s37
      %p46 = scmp.eq.s32.totalorder %s17, 3
      %p47 = por %p45, %p46
      %p48 = scmp.ne.s32.totalorder %s37, %s38
      %p49 = scmp.eq.s32.totalorder %s17, 0
      %p50 = por %p48, %p49
      %p51 = scmp.ne.s32.totalorder %s37, %s38
      %p52 = scmp.eq.s32.totalorder %s18, 3
      %p53 = por %p51, %p52
      %p55 = scmp.ne.s32.totalorder %s38, %s54
      %p56 = scmp.eq.s32.totalorder %s18, 0
      %p57 = por %p55, %p56
      %s58 = ssub.s32 %s20, %s27
      %p59 = scmp.eq.s32.totalorder %s58, 0
      %s61 = sadd.s32 %s60, 1
      %s62 = scalar_select %p59, %s60, %s61
      %p65 = pneg %p59
      %p66 = scmp.eq.s32.totalorder %s12, 3
      %p67 = por %p65, %p66
      %p68 = scmp.ne.s32.totalorder %s60, %s63
      %p69 = scmp.eq.s32.totalorder %s12, 0
      %p70 = por %p68, %p69
      %p71 = scmp.ne.s32.totalorder %s60, %s63
      %p72 = scmp.eq.s32.totalorder %s17, 3
      %p73 = por %p71, %p72
      %p74 = scmp.ne.s32.totalorder %s63, %s64
      %p75 = scmp.eq.s32.totalorder %s17, 0
      %p76 = por %p74, %p75
      %p77 = scmp.ne.s32.totalorder %s63, %s64
      %p78 = scmp.eq.s32.totalorder %s18, 3
      %p79 = por %p77, %p78
      %p81 = scmp.ne.s32.totalorder %s64, %s80
      %p82 = scmp.eq.s32.totalorder %s18, 0
      %p83 = por %p81, %p82
      %s84 = ssub.s32 %s20, %s27
      %p85 = scmp.eq.s32.totalorder %s84, 0
      %s87 = sadd.s32 %s86, 1
      %s88 = scalar_select %p85, %s86, %s87
      %p91 = pneg %p85
      %p92 = scmp.eq.s32.totalorder %s12, 3
      %p93 = por %p91, %p92
      %p94 = scmp.ne.s32.totalorder %s86, %s89
      %p95 = scmp.eq.s32.totalorder %s12, 0
      %p96 = por %p94, %p95
      %p97 = scmp.ne.s32.totalorder %s86, %s89
      %p98 = scmp.eq.s32.totalorder %s17, 3
      %p99 = por %p97, %p98
      %p100 = scmp.ne.s32.totalorder %s89, %s90
      %p101 = scmp.eq.s32.totalorder %s17, 0
      %p102 = por %p100, %p101
      %p103 = scmp.ne.s32.totalorder %s89, %s90
      %p104 = scmp.eq.s32.totalorder %s18, 3
      %p105 = por %p103, %p104
      %p107 = scmp.ne.s32.totalorder %s90, %s106
      %p108 = scmp.eq.s32.totalorder %s18, 0
      %p109 = por %p107, %p108
      %s110 = ssub.s32 %s19, %s31
      %p111 = scmp.eq.s32.totalorder %s110, 0
      %s113 = sadd.s32 %s112, 1
      %s114 = scalar_select %p111, %s112, %s113
      %p117 = pneg %p111
      %p118 = scmp.eq.s32.totalorder %s12, 3
      %p119 = por %p117, %p118
      %p120 = scmp.ne.s32.totalorder %s112, %s115
      %p121 = scmp.eq.s32.totalorder %s12, 0
      %p122 = por %p120, %p121
      %p123 = scmp.ne.s32.totalorder %s112, %s115
      %p124 = scmp.eq.s32.totalorder %s17, 3
      %p125 = por %p123, %p124
      %p126 = scmp.ne.s32.totalorder %s115, %s116
      %p127 = scmp.eq.s32.totalorder %s17, 0
      %p128 = por %p126, %p127
      %p129 = scmp.ne.s32.totalorder %s115, %s116
      %p130 = scmp.eq.s32.totalorder %s18, 3
      %p131 = por %p129, %p130
      %p133 = scmp.ne.s32.totalorder %s116, %s132
      %p134 = scmp.eq.s32.totalorder %s18, 0
      %p135 = por %p133, %p134
      %p136 = scmp.le.s32.totalorder 1, %s12
      %p137 = scmp.lt.s32.totalorder %s12, 5
      %p138 = pnand %p136, %p137
      %p139 = pneg %p138
      // Predicated region
      $region9: #{tpu_custom_call.1} parent=5 // pred_check
        _
      $region10: #{tpu_custom_call.1} parent=5 // pred_check_branch
        %141 = sbr.rel (%p138) target = $region12
      $region11: #{tpu_custom_call.1} parent=5 // pred_region
        %s142 = ssub.s32 %s12, 1
      $region12: #{tpu_custom_call.1} parent=5 // pred_fallthru
        _
      %p143 = scmp.lt.s32.totalorder %s12, 4
      // Predicated region
      $region13: #{tpu_custom_call.1} parent=5 // pred_check
        %p144 = pneg %p143
      $region14: #{tpu_custom_call.1} parent=5 // pred_check_branch
        %146 = sbr.rel (%p144) target = $region16
      $region15: #{tpu_custom_call.1} parent=5 // pred_region
        // Predicated region
        $region17: #{tpu_custom_call.1} parent=15 // pred_check
          %p147 = pneg %p44
        $region18: #{tpu_custom_call.1} parent=15 // pred_check_branch
          %149 = sbr.rel (%p147) target = $region20
        $region19: #{tpu_custom_call.1} parent=15 // pred_region
          %p150 = scmp.lt.s32.totalorder %s19, 1
          %s151 = scalar_select %p150, %s19, 1
          %s152 = smul.addr %s151, 8
          %s153 = scalar_lea.vmem %s0, %s152
        $region20: #{tpu_custom_call.1} parent=15 // pred_fallthru
          _
        // Predicated region
        $region21: #{tpu_custom_call.1} parent=15 // pred_check
          %p154 = pneg %p70
        $region22: #{tpu_custom_call.1} parent=15 // pred_check_branch
          %156 = sbr.rel (%p154) target = $region24
        $region23: #{tpu_custom_call.1} parent=15 // pred_region
          %s157 = sand.u32 %s60, 1
          %s158 = sand.u32 %s60, 1
          %s159 = smul.addr %s158, 128
          %s160 = scalar_lea.vmem [#allocation3], %s159
          %s161 = smul.u32 2, %s20
          %s162 = smul.addr %s161, 8
          %s163 = scalar_lea.vmem %s1, %s162
          // Predicated region
          $region25: #{tpu_custom_call.1} parent=23 // pred_check
            _
          $region26: #{tpu_custom_call.1} parent=23 // pred_check_branch
            %165 = sbr.rel (0) target = $region28
          $region27: #{tpu_custom_call.1} parent=23 // pred_region
            // Predicated region
            $region29: #{tpu_custom_call.1} parent=27 // pred_check
              _
            $region30: #{tpu_custom_call.1} parent=27 // pred_check_branch
              %167 = sbr.rel (0) target = $region32
            $region31: #{tpu_custom_call.1} parent=27 // pred_region
              loop: start=0, step=1, limit=1
              $region33: #{tpu_custom_call.1} parent=31 // loop_pre_header
                _
              $region34: #{tpu_custom_call.1} parent=31 // loop_header
                %s169 = sphi 0, %s173
                %p170 = scmp.ge.s32.totalorder %s169, 1
                %s174 = sphi %s163, %s163
                %s175 = sphi %s160, %s160
              $region35: #{tpu_custom_call.1} parent=31 // loop_header_branch
                %172 = sbr.rel (%p170) target = $region39
              $region36: #{tpu_custom_call.1} parent=31 // loop_body
                %v176 = vld [vmem:[%s174] sm:$0xff]
                %177 = vst [vmem:[%s175] sm:$0xff] %v176
                %v178 = vld [vmem:[%s174 + $0x8] sm:$0xff]
                %179 = vst [vmem:[%s175 + $0x8] sm:$0xff] %v178
                %v180 = vld [vmem:[%s174 + $0x20] sm:$0xff]
                %181 = vst [vmem:[%s175 + $0x10] sm:$0xff] %v180
                %v182 = vld [vmem:[%s174 + $0x28] sm:$0xff]
                %183 = vst [vmem:[%s175 + $0x18] sm:$0xff] %v182
                %v184 = vld [vmem:[%s174 + $0x40] sm:$0xff]
                %185 = vst [vmem:[%s175 + $0x20] sm:$0xff] %v184
                %v186 = vld [vmem:[%s174 + $0x48] sm:$0xff]
                %187 = vst [vmem:[%s175 + $0x28] sm:$0xff] %v186
                %v188 = vld [vmem:[%s174 + $0x60] sm:$0xff]
                %189 = vst [vmem:[%s175 + $0x30] sm:$0xff] %v188
                %v190 = vld [vmem:[%s174 + $0x68] sm:$0xff]
                %191 = vst [vmem:[%s175 + $0x38] sm:$0xff] %v190
                %v192 = vld [vmem:[%s174 + $0x80] sm:$0xff]
                %193 = vst [vmem:[%s175 + $0x40] sm:$0xff] %v192
                %v194 = vld [vmem:[%s174 + $0x88] sm:$0xff]
                %195 = vst [vmem:[%s175 + $0x48] sm:$0xff] %v194
                %v196 = vld [vmem:[%s174 + $0xa0] sm:$0xff]
                %197 = vst [vmem:[%s175 + $0x50] sm:$0xff] %v196
                %v198 = vld [vmem:[%s174 + $0xa8] sm:$0xff]
                %199 = vst [vmem:[%s175 + $0x58] sm:$0xff] %v198
                %v200 = vld [vmem:[%s174 + $0xc0] sm:$0xff]
                %201 = vst [vmem:[%s175 + $0x60] sm:$0xff] %v200
                %v202 = vld [vmem:[%s174 + $0xc8] sm:$0xff]
                %203 = vst [vmem:[%s175 + $0x68] sm:$0xff] %v202
                %v204 = vld [vmem:[%s174 + $0xe0] sm:$0xff]
                %205 = vst [vmem:[%s175 + $0x70] sm:$0xff] %v204
                %v206 = vld [vmem:[%s174 + $0xe8] sm:$0xff]
                %207 = vst [vmem:[%s175 + $0x78] sm:$0xff] %v206
              $region37: #{tpu_custom_call.1} parent=31 // loop_footer
                %s173 = sadd.s32 1, %s169
              $region38: #{tpu_custom_call.1} parent=31 // loop_footer_branch
                %168 = sbr.rel target = $region34
              $region39: #{tpu_custom_call.1} parent=31 // loop_exit
                _
            $region32: #{tpu_custom_call.1} parent=27 // pred_fallthru
              _
            // Predicated region
            $region40: #{tpu_custom_call.1} parent=27 // pred_check
              _
            $region41: #{tpu_custom_call.1} parent=27 // pred_check_branch
              %209 = sbr.rel target = $region43
            $region42: #{tpu_custom_call.1} parent=27 // pred_region
              _
            $region43: #{tpu_custom_call.1} parent=27 // pred_fallthru
              _
          $region28: #{tpu_custom_call.1} parent=23 // pred_fallthru
            _
          %210 = vnop
        $region24: #{tpu_custom_call.1} parent=15 // pred_fallthru
          _
        // Predicated region
        $region44: #{tpu_custom_call.1} parent=15 // pred_check
          %p211 = pneg %p96
        $region45: #{tpu_custom_call.1} parent=15 // pred_check_branch
          %213 = sbr.rel (%p211) target = $region47
        $region46: #{tpu_custom_call.1} parent=15 // pred_region
          %s214 = smul.u32 16, %s20
          %p215 = scmp.lt.s32.totalorder %s214, 31
          %s216 = scalar_select %p215, %s214, 31
          %s217 = smul.addr %s216, 8
          %s218 = scalar_lea.vmem %s2, %s217
          %s219 = smul.u32 16, %s20
        $region47: #{tpu_custom_call.1} parent=15 // pred_fallthru
          _
      $region16: #{tpu_custom_call.1} parent=5 // pred_fallthru
        _
      %p220 = scmp.le.s32.totalorder 1, %s12
      %p221 = scmp.lt.s32.totalorder %s12, 5
      %p222 = pnand %p220, %p221
      %p223 = pneg %p222
      // Predicated region
      $region48: #{tpu_custom_call.1} parent=5 // pred_check
        _
      $region49: #{tpu_custom_call.1} parent=5 // pred_check_branch
        %225 = sbr.rel (%p222) target = $region51
      $region50: #{tpu_custom_call.1} parent=5 // pred_region
        %s226 = ssub.s32 %s12, 1
        %s227 = sand.u32 %s63, 1
        %s228 = sand.u32 %s63, 1
        %s229 = smul.addr %s228, 128
        %s230 = scalar_lea.vmem [#allocation3], %s229
        // Predicated region
        $region52: #{tpu_custom_call.1} parent=50 // pred_check
          %p231 = pneg %p76
        $region53: #{tpu_custom_call.1} parent=50 // pred_check_branch
          %233 = sbr.rel (%p231) target = $region55
        $region54: #{tpu_custom_call.1} parent=50 // pred_region
          _
        $region55: #{tpu_custom_call.1} parent=50 // pred_fallthru
          _
        %p234 = scmp.lt.s32.totalorder %s21, 1
        %s235 = scalar_select %p234, %s21, 1
        %s236 = smul.addr %s235, 8
        %s237 = scalar_lea.vmem %s0, %s236
        %p238 = pneg %p50
        %p239 = pneg %p47
        %s240 = sand.u32 %s63, 1
        %s241 = sand.u32 %s63, 1
        %s242 = smul.addr %s241, 128
        %s243 = scalar_lea.vmem [#allocation3], %s242
        %p244 = pneg %p76
        %p245 = pneg %p73
        %s246 = smul.u32 16, %s22
        %p247 = scmp.lt.s32.totalorder %s246, 31
        %s248 = scalar_select %p247, %s246, 31
        %s249 = smul.addr %s248, 8
        %s250 = scalar_lea.vmem %s2, %s249
        %p251 = pneg %p102
        %p252 = pneg %p99
        %p253 = pneg %p128
        %p254 = pneg %p125
        %s255 = sand.u32 %s115, 1
        %s256 = scalar_lea.sflag [#allocation5], %s255
        %s257 = sand.u32 %s115, 1
        %s258 = smul.addr %s257, 8
        %s259 = scalar_lea.vmem [#allocation4], %s258
        %p260 = scmp.lt.s32.totalorder %s21, 1
        %s261 = scalar_select %p260, %s21, 1
        %s262 = smul.addr %s261, 8
        %s263 = scalar_lea.vmem %s0, %s262
        %s264 = smul.u32 2, %s22
        %s265 = smul.u32 16, %s22
        %p266 = scmp.lt.s32.totalorder %s265, 31
        %s267 = scalar_select %p266, %s265, 31
        %s268 = smul.addr %s267, 8
        %s269 = scalar_lea.vmem %s2, %s268
        %s270 = smul.u32 16, %s22
        %v271 = vld [vmem:[%s263] sm:$0xff]
        %v272 = vld [vmem:[%s230] sm:$0xff]
        %v273 = vld [vmem:[%s230 + $0x8] sm:$0xff]
        %v274 = vld [vmem:[%s230 + $0x10] sm:$0xff]
        %v275 = vld [vmem:[%s230 + $0x18] sm:$0xff]
        %v276 = vld [vmem:[%s230 + $0x20] sm:$0xff]
        %v277 = vld [vmem:[%s230 + $0x28] sm:$0xff]
        %v278 = vld [vmem:[%s230 + $0x30] sm:$0xff]
        %v279 = vld [vmem:[%s230 + $0x38] sm:$0xff]
        %v280 = vld [vmem:[%s230 + $0x40] sm:$0xff]
        %v281 = vld [vmem:[%s230 + $0x48] sm:$0xff]
        %v282 = vld [vmem:[%s230 + $0x50] sm:$0xff]
        %v283 = vld [vmem:[%s230 + $0x58] sm:$0xff]
        %v284 = vld [vmem:[%s230 + $0x60] sm:$0xff]
        %v285 = vld [vmem:[%s230 + $0x68] sm:$0xff]
        %v286 = vld [vmem:[%s230 + $0x70] sm:$0xff]
        %v287 = vld [vmem:[%s230 + $0x78] sm:$0xff]
        %vm288 = vcmask 523264
        %v290 = vsel %vm288, %v271, 0
        %292 = vmatprep.subr.mxu0 %v273
        %293 = vmatpush1.msra.mxu0 %v272
        %294 = vmatprep.subr.mxu0 %v275
        %295 = vmatpush1.msra.mxu0 %v274
        %296 = vmatprep.subr.mxu0 %v277
        %297 = vmatpush1.msra.mxu0 %v276
        %298 = vmatprep.subr.mxu0 %v279
        %299 = vmatpush1.msra.mxu0 %v278
        %300 = vmatprep.subr.mxu0 %v281
        %301 = vmatpush1.msra.mxu0 %v280
        %302 = vmatprep.subr.mxu0 %v283
        %303 = vmatpush1.msra.mxu0 %v282
        %304 = vmatprep.subr.mxu0 %v285
        %305 = vmatpush1.msra.mxu0 %v284
        %306 = vmatprep.subr.mxu0 %v287
        %307 = vmatpush1.msra.mxu0 %v286
        %308 = vmatprep.subr.mxu0 0.0
        %309 = vmatpush1.msra.mxu0 0.0
        %310 = vmatprep.subr.mxu0 0.0
        %311 = vmatpush1.msra.mxu0 0.0
        %312 = vmatprep.subr.mxu0 0.0
        %313 = vmatpush1.msra.mxu0 0.0
        %314 = vmatprep.subr.mxu0 0.0
        %315 = vmatpush1.msra.mxu0 0.0
        %316 = vmatprep.subr.mxu0 0.0
        %317 = vmatpush1.msra.mxu0 0.0
        %318 = vmatprep.subr.mxu0 0.0
        %319 = vmatpush1.msra.mxu0 0.0
        %320 = vmatprep.subr.mxu0 0.0
        %321 = vmatpush1.msra.mxu0 0.0
        %322 = vmatprep.subr.mxu0 0.0
        %323 = vmatpush1.msra.mxu0 0.0
        %324 = vmatprep.subr.mxu0 0.0
        %325 = vmatpush1.msra.mxu0 0.0
        %326 = vmatprep.subr.mxu0 0.0
        %327 = vmatpush1.msra.mxu0 0.0
        %328 = vmatprep.subr.mxu0 0.0
        %329 = vmatpush1.msra.mxu0 0.0
        %330 = vmatprep.subr.mxu0 0.0
        %331 = vmatpush1.msra.mxu0 0.0
        %332 = vmatprep.subr.mxu0 0.0
        %333 = vmatpush1.msra.mxu0 0.0
        %334 = vmatprep.subr.mxu0 0.0
        %335 = vmatpush1.msra.mxu0 0.0
        %336 = vmatprep.subr.mxu0 0.0
        %337 = vmatpush1.msra.mxu0 0.0
        %338 = vmatprep.subr.mxu0 0.0
        %339 = vmatpush1.msra.mxu0 0.0
        %340 = vmatprep.subr.mxu0 0.0
        %341 = vmatpush1.msra.mxu0 0.0
        %342 = vmatprep.subr.mxu0 0.0
        %343 = vmatpush1.msra.mxu0 0.0
        %344 = vmatprep.subr.mxu0 0.0
        %345 = vmatpush1.msra.mxu0 0.0
        %346 = vmatprep.subr.mxu0 0.0
        %347 = vmatpush1.msra.mxu0 0.0
        %348 = vmatprep.subr.mxu0 0.0
        %349 = vmatpush1.msra.mxu0 0.0
        %350 = vmatprep.subr.mxu0 0.0
        %351 = vmatpush1.msra.mxu0 0.0
        %352 = vmatprep.subr.mxu0 0.0
        %353 = vmatpush1.msra.mxu0 0.0
        %354 = vmatprep.subr.mxu0 0.0
        %355 = vmatpush1.msra.mxu0 0.0
        %356 = vmatprep.mubr.f32.mxu0 0.0
        %357 = vmatmul.mubr.f32.gmra.mrb[0].mxu0 %v290
        %v358 = vpop.f32.mrb[0].mxu0
        %v359 = vadd.f32 0.0, %v358
        %v360 = vpop.f32.mrb[0].mxu0
        %v361 = vadd.f32 0.0, %v360
        %362 = vdwg.mxu0
        %v363 = vmul.f32 %v359, 0.5
        %v364 = vmul.f32 %v359, 0.044715
        %v365 = vmul.f32 %v364, %v359
        %v366 = vmul.f32 %v365, %v359
        %v367 = vadd.f32 %v359, %v366
        %v368 = vmul.f32 %v367, 0.7978846
        %v369 = vtanh.pop %v368
        %v370 = vadd.f32 %v369, 1.0
        %v371 = vmul.f32 %v363, %v370
        %v372 = vmul.f32 %v371, %v361
        %v373 = vld [vmem:[%s269] sm:$0xff]
        %v374 = vld [vmem:[%s269 + $0x8] sm:$0xff]
        %v375 = vld [vmem:[%s269 + $0x10] sm:$0xff]
        %v376 = vld [vmem:[%s269 + $0x18] sm:$0xff]
        %v377 = vld [vmem:[%s269 + $0x20] sm:$0xff]
        %v378 = vld [vmem:[%s269 + $0x28] sm:$0xff]
        %v379 = vld [vmem:[%s269 + $0x30] sm:$0xff]
        %v380 = vld [vmem:[%s269 + $0x38] sm:$0xff]
        %v381 = vld [vmem:[%s269 + $0x40] sm:$0xff]
        %v382 = vld [vmem:[%s269 + $0x48] sm:$0xff]
        %v383 = vld [vmem:[%s269 + $0x50] sm:$0xff]
        %v384 = vld [vmem:[%s269 + $0x58] sm:$0xff]
        %v385 = vld [vmem:[%s269 + $0x60] sm:$0xff]
        %v386 = vld [vmem:[%s269 + $0x68] sm:$0xff]
        %v387 = vld [vmem:[%s269 + $0x70] sm:$0xff]
        %v388 = vld [vmem:[%s269 + $0x78] sm:$0xff]
        %389 = vmatprep.subr.mxu0 0.0
        %390 = vmatpush1.msra.mxu0 %v373
        %391 = vmatprep.subr.mxu0 0.0
        %392 = vmatpush1.msra.mxu0 %v374
        %393 = vmatprep.subr.mxu0 0.0
        %394 = vmatpush1.msra.mxu0 %v375
        %395 = vmatprep.subr.mxu0 0.0
        %396 = vmatpush1.msra.mxu0 %v376
        %397 = vmatprep.subr.mxu0 0.0
        %398 = vmatpush1.msra.mxu0 %v377
        %399 = vmatprep.subr.mxu0 0.0
        %400 = vmatpush1.msra.mxu0 %v378
        %401 = vmatprep.subr.mxu0 0.0
        %402 = vmatpush1.msra.mxu0 %v379
        %403 = vmatprep.subr.mxu0 0.0
        %404 = vmatpush1.msra.mxu0 %v380
        %405 = vmatprep.subr.mxu0 0.0
        %406 = vmatpush1.msra.mxu0 %v381
        %407 = vmatprep.subr.mxu0 0.0
        %408 = vmatpush1.msra.mxu0 %v382
        %409 = vmatprep.subr.mxu0 0.0
        %410 = vmatpush1.msra.mxu0 %v383
        %411 = vmatprep.subr.mxu0 0.0
        %412 = vmatpush1.msra.mxu0 %v384
        %413 = vmatprep.subr.mxu0 0.0
        %414 = vmatpush1.msra.mxu0 %v385
        %415 = vmatprep.subr.mxu0 0.0
        %416 = vmatpush1.msra.mxu0 %v386
        %417 = vmatprep.subr.mxu0 0.0
        %418 = vmatpush1.msra.mxu0 %v387
        %419 = vmatprep.subr.mxu0 0.0
        %420 = vmatpush1.msra.mxu0 %v388
        %421 = vmatprep.subr.mxu0 0.0
        %422 = vmatpush1.msra.mxu0 0.0
        %423 = vmatprep.subr.mxu0 0.0
        %424 = vmatpush1.msra.mxu0 0.0
        %425 = vmatprep.subr.mxu0 0.0
        %426 = vmatpush1.msra.mxu0 0.0
        %427 = vmatprep.subr.mxu0 0.0
        %428 = vmatpush1.msra.mxu0 0.0
        %429 = vmatprep.subr.mxu0 0.0
        %430 = vmatpush1.msra.mxu0 0.0
        %431 = vmatprep.subr.mxu0 0.0
        %432 = vmatpush1.msra.mxu0 0.0
        %433 = vmatprep.subr.mxu0 0.0
        %434 = vmatpush1.msra.mxu0 0.0
        %435 = vmatprep.subr.mxu0 0.0
        %436 = vmatpush1.msra.mxu0 0.0
        %437 = vmatprep.subr.mxu0 0.0
        %438 = vmatpush1.msra.mxu0 0.0
        %439 = vmatprep.subr.mxu0 0.0
        %440 = vmatpush1.msra.mxu0 0.0
        %441 = vmatprep.subr.mxu0 0.0
        %442 = vmatpush1.msra.mxu0 0.0
        %443 = vmatprep.subr.mxu0 0.0
        %444 = vmatpush1.msra.mxu0 0.0
        %445 = vmatprep.subr.mxu0 0.0
        %446 = vmatpush1.msra.mxu0 0.0
        %447 = vmatprep.subr.mxu0 0.0
        %448 = vmatpush1.msra.mxu0 0.0
        %449 = vmatprep.subr.mxu0 0.0
        %450 = vmatpush1.msra.mxu0 0.0
        %451 = vmatprep.subr.mxu0 0.0
        %452 = vmatpush1.msra.mxu0 0.0
        %453 = vmatprep.mubr.f32.mxu0 0.0
        %454 = vmatmul.mubr.f32.gmra.mrb[0].mxu0 %v372
        %v455 = vpop.f32.mrb[0].mxu0
        %v456 = vadd.f32 0.0, %v455
        %v457 = vpop.f32.mrb[0].mxu0
        %458 = vdwg.mxu0
        %p459 = scmp.eq.s32.totalorder %s22, 0
        // Predicated region
        $region56: #{tpu_custom_call.1} parent=50 // pred_check
          %p460 = pneg %p459
        $region57: #{tpu_custom_call.1} parent=50 // pred_check_branch
          %462 = sbr.rel (%p460) target = $region59
        $region58: #{tpu_custom_call.1} parent=50 // pred_region
          %463 = vst.msk [vmem:[#allocation2] sm:$0xff] %vm288, %v456
        $region59: #{tpu_custom_call.1} parent=50 // pred_fallthru
          _
        %p464 = scmp.gt.s32.totalorder %s22, 0
        // Predicated region
        $region60: #{tpu_custom_call.1} parent=50 // pred_check
          %p465 = pneg %p464
        $region61: #{tpu_custom_call.1} parent=50 // pred_check_branch
          %467 = sbr.rel (%p465) target = $region63
        $region62: #{tpu_custom_call.1} parent=50 // pred_region
          %v468 = vld [vmem:[#allocation2] sm:$0xff]
          %v469 = vadd.f32 %v468, %v456
          %470 = vst.msk [vmem:[#allocation2] sm:$0xff] %vm288, %v469
        $region63: #{tpu_custom_call.1} parent=50 // pred_fallthru
          _
        %p471 = scmp.eq.s32.totalorder %s22, 1
        // Predicated region
        $region64: #{tpu_custom_call.1} parent=50 // pred_check
          %p472 = pneg %p471
        $region65: #{tpu_custom_call.1} parent=50 // pred_check_branch
          %474 = sbr.rel (%p472) target = $region67
        $region66: #{tpu_custom_call.1} parent=50 // pred_region
          %v475 = vld [vmem:[#allocation2] sm:$0xff]
          %476 = vst.msk [vmem:[%s259] sm:$0xff] %vm288, %v475
        $region67: #{tpu_custom_call.1} parent=50 // pred_fallthru
          _
        %s477 = sand.u32 %s115, 1
        %s478 = scalar_lea.sflag [#allocation5], %s477
        %s479 = sand.u32 %s115, 1
        %s480 = smul.addr %s479, 8
        %s481 = scalar_lea.vmem [#allocation4], %s480
        // Predicated region
        $region68: #{tpu_custom_call.1} parent=50 // pred_check
          %p482 = pneg %p125
        $region69: #{tpu_custom_call.1} parent=50 // pred_check_branch
          %484 = sbr.rel (%p482) target = $region71
        $region70: #{tpu_custom_call.1} parent=50 // pred_region
          %s486 = ssub.s32 128, 128
          %487 = vsyncadd %s478, %s486
          %s488 = smul.addr %s21, 128
          %s489 = scalar_lea.hbm %s3, %s488
          %s491 = sshll.u32 %s481, 4
          %s492 = int_to_ptr.vmem [resolvable:$true] %s491
          %494 = dma.vmem_to_hbm [thread:$0]  %s492, 128, %s489, %s478
        $region71: #{tpu_custom_call.1} parent=50 // pred_fallthru
          _
      $region51: #{tpu_custom_call.1} parent=5 // pred_fallthru
        _
      %p495 = scmp.le.s32.totalorder 2, %s12
      // Predicated region
      $region72: #{tpu_custom_call.1} parent=5 // pred_check
        %p496 = pneg %p495
      $region73: #{tpu_custom_call.1} parent=5 // pred_check_branch
        %498 = sbr.rel (%p496) target = $region75
      $region74: #{tpu_custom_call.1} parent=5 // pred_region
        %s499 = ssub.s32 %s12, 2
        // Predicated region
        $region76: #{tpu_custom_call.1} parent=74 // pred_check
          %p500 = pneg %p131
        $region77: #{tpu_custom_call.1} parent=74 // pred_check_branch
          %502 = sbr.rel (%p500) target = $region79
        $region78: #{tpu_custom_call.1} parent=74 // pred_region
          %s503 = sand.u32 %s116, 1
          %s504 = scalar_lea.sflag [#allocation5], %s503
          %s505 = sand.u32 %s116, 1
          %s506 = smul.addr %s505, 8
          %s507 = scalar_lea.vmem [#allocation4], %s506
          %508 = dma.done %s504, 128
        $region79: #{tpu_custom_call.1} parent=74 // pred_fallthru
          _
      $region75: #{tpu_custom_call.1} parent=5 // pred_fallthru
        _
    $region6: #{tpu_custom_call.1} parent=1 // loop_footer
      %s16 = sadd.s32 1, %s12
    $region7: #{tpu_custom_call.1} parent=1 // loop_footer_branch
      %11 = sbr.rel target = $region3
    $region8: #{tpu_custom_call.1} parent=1 // loop_exit
      _
    %509 = vsyncpa [#allocation5], 1
    %s510 = scalar_lea.sflag [#allocation5], 1
    %511 = vsyncpa %s510, 1

</llo_original>
